<compile_context>
chip_gen: v7x
topology: tpu7x:2x2x1
jax: 0.10.0
libtpu: 0.0.40
codegen_flags: <defaults>
</compile_context>

<pallas_src>
import math

import numpy as np
import jax
import jax.numpy as jnp
from jax import lax
from jax.experimental import pallas as pl
from jax.experimental.pallas import tpu as pltpu

_SUBLANE = 8
_TARGET_BLOCK_BYTES = 2 * 1024 * 1024  # per-input block (x4 when double-buffered in+out)


def _mix32_py(x):
    """lowbias32 mixer on a Python int (pre-hash the seed at trace time)."""
    x &= 0xFFFFFFFF
    x ^= x >> 16
    x = (x * 0x7FEB352D) & 0xFFFFFFFF
    x ^= x >> 15
    x = (x * 0x846CA68B) & 0xFFFFFFFF
    x ^= x >> 16
    return x


def _mix32(x):
    """lowbias32 mixer on a uint32 array: counter -> well-scrambled random bits."""
    x = x ^ (x >> 16)
    x = x * np.uint32(0x7FEB352D)
    x = x ^ (x >> 15)
    x = x * np.uint32(0x846CA68B)
    x = x ^ (x >> 16)
    return x


def _bits_to_open_unit(bits):
    """uint32 random bits -> uniform float32 in (0, 1]."""
    f = lax.bitcast_convert_type((bits >> 9) | np.uint32(0x3F800000), jnp.float32)
    return 2.0 - f  # [1, 2) -> (0, 1]


def _make_noise_kernel(seed, tile_rows, lanes):
    half = tile_rows // 2          # tile_rows is a multiple of 8 -> even
    half_elems = half * lanes
    seed_c = np.uint32(_mix32_py(int(seed)))   # numpy scalar -> literal, not captured

    def kernel(x_ref, o_ref):
        pid = pl.program_id(0)
        # Unique global index per half-tile element (counter-based => grid-order
        # independent => the grid axis can be "parallel").
        row = lax.broadcasted_iota(jnp.int32, (half, lanes), 0)
        col = lax.broadcasted_iota(jnp.int32, (half, lanes), 1)
        idx_i32 = pid * half_elems + row * lanes + col
        idx = lax.bitcast_convert_type(idx_i32, jnp.uint32)

        ctr = (idx + seed_c) << 1                              # even counters
        u1 = _bits_to_open_unit(_mix32(ctr))                   # stream 0
        u2 = _bits_to_open_unit(_mix32(ctr | np.uint32(1)))    # stream 1

        # Paired Box-Muller: one log/sqrt per TWO output elements.
        r = jnp.sqrt(-2.0 * jnp.log(u1))
        theta = (2.0 * math.pi) * u2
        z0 = r * jnp.sin(theta + 0.5 * math.pi)                # = r * cos(theta)
        z1 = r * jnp.sin(theta)

        o_ref[:half, :] = x_ref[:half, :] + z0
        o_ref[half:, :] = x_ref[half:, :] + z1

    return kernel


def _choose_lanes(n):
    """Widest lane-dense layout that needs no padding; else pad to 512 lanes."""
    for lanes in (2048, 1024, 512, 256, 128):
        if n % (lanes * _SUBLANE) == 0:
            return lanes, 0
    lanes = 512
    pad = (-n) % (lanes * _SUBLANE)
    return lanes, pad


def gaussian_noise_layer(x, seed=0, training=True):
    """Forward pass of GaussianNoiseLayer (matches the PyTorch module)."""
    if not training:
        return x  # eval mode: exact pass-through

    orig_shape, orig_dtype = x.shape, x.dtype
    # TODO(synk): for bf16 inputs, read bf16 inside the kernel instead of casting here.
    xf = x if x.dtype == jnp.float32 else x.astype(jnp.float32)

    flat = xf.reshape(-1)
    n = flat.shape[0]
    lanes, pad = _choose_lanes(n)
    if pad:
        flat = jnp.pad(flat, (0, pad))
    rows = (n + pad) // lanes
    x2d = flat.reshape(rows, lanes)

    # Block sizing: ~2 MiB per input block, tile rows a multiple of 8 dividing rows.
    target_rows = max(_SUBLANE, _TARGET_BLOCK_BYTES // (4 * lanes))
    tile = min(rows, target_rows)
    tile = max(tile - tile % _SUBLANE, _SUBLANE)
    while rows % tile:
        tile -= _SUBLANE
    grid = (rows // tile,)

    kernel = _make_noise_kernel(seed, tile, lanes)
    out2d = pl.pallas_call(
        kernel,
        out_shape=jax.ShapeDtypeStruct((rows, lanes), jnp.float32),
        grid=grid,
        in_specs=[pl.BlockSpec((tile, lanes), lambda i: (i, 0))],
        out_specs=pl.BlockSpec((tile, lanes), lambda i: (i, 0)),
        compiler_params=pltpu.CompilerParams(
            dimension_semantics=("parallel",)),  # tiles are independent (counter PRNG)
    )(x2d)

    out = out2d.reshape(-1)
    if pad:
        out = out[:n]
    out = out.reshape(orig_shape)
    if orig_dtype != jnp.float32:
        out = out.astype(orig_dtype)
    return out


if __name__ == "__main__":
    key = jax.random.PRNGKey(0)
    x = jax.random.normal(key, (2, 4, 16, 16), dtype=jnp.float32)  # NCHW

    y_train = gaussian_noise_layer(x, seed=0, training=True)
    y_eval = gaussian_noise_layer(x, seed=0, training=False)
    jax.block_until_ready(y_train)
    jax.block_until_ready(y_eval)

    assert y_train.shape == x.shape and y_train.dtype == x.dtype
    assert bool(jnp.all(y_eval == x))               # eval: exact identity

    noise = y_train - x
    std = float(jnp.std(noise))
    mean = float(jnp.mean(noise))
    assert 0.5 < std < 2.0, f"noise std {std} not ~1"
    assert abs(mean) < 0.25, f"noise mean {mean} not ~0"

    print("KERNEL_OK")
</pallas_src>

<mosaic_0001>
module attributes {stable_mosaic.version = 11 : i64} {
  func.func @kernel(%arg0: i32, %arg1: memref<8x256xf32, #tpu.memory_space<vmem>>, %arg2: memref<8x256xf32, #tpu.memory_space<vmem>>) attributes {dimension_semantics = [#tpu.dimension_semantics<parallel>], iteration_bounds = array<i64: 1>, scalar_prefetch = 0 : i64, scratch_operands = 0 : i64, tpu.core_type = #tpu.core_type<tc>, window_params = [{transform_indices = @transform_0, window_bounds = array<i64: 8, 256>}, {transform_indices = @transform_1, window_bounds = array<i64: 8, 256>}]} {
    %0 = tpu.iota {dimensions = array<i32: 0>} : vector<4x256xi32>
    %1 = tpu.iota {dimensions = array<i32: 1>} : vector<4x256xi32>
    %c1024_i32 = arith.constant 1024 : i32
    %2 = arith.muli %arg0, %c1024_i32 : i32
    %c256_i32 = arith.constant 256 : i32
    %3 = vector.broadcast %c256_i32 : i32 to vector<4x256xi32>
    %4 = arith.muli %0, %3 : vector<4x256xi32>
    %5 = vector.broadcast %2 : i32 to vector<4x256xi32>
    %6 = arith.addi %5, %4 : vector<4x256xi32>
    %7 = arith.addi %6, %1 : vector<4x256xi32>
    %8 = tpu.bitcast %7 : vector<4x256xi32> -> vector<4x256xi32>
    %c0_i32 = arith.constant 0 : i32
    %9 = vector.broadcast %c0_i32 : i32 to vector<4x256xi32>
    %10 = arith.addi %8, %9 : vector<4x256xi32>
    %c1_i32 = arith.constant 1 : i32
    %11 = vector.broadcast %c1_i32 : i32 to vector<4x256xi32>
    %12 = arith.shli %10, %11 : vector<4x256xi32>
    %c16_i32 = arith.constant 16 : i32
    %13 = vector.broadcast %c16_i32 : i32 to vector<4x256xi32>
    %14 = arith.shrui %12, %13 : vector<4x256xi32>
    %15 = arith.xori %12, %14 : vector<4x256xi32>
    %c2146121005_i32 = arith.constant 2146121005 : i32
    %16 = vector.broadcast %c2146121005_i32 : i32 to vector<4x256xi32>
    %17 = arith.muli %15, %16 : vector<4x256xi32>
    %c15_i32 = arith.constant 15 : i32
    %18 = vector.broadcast %c15_i32 : i32 to vector<4x256xi32>
    %19 = arith.shrui %17, %18 : vector<4x256xi32>
    %20 = arith.xori %17, %19 : vector<4x256xi32>
    %c-2073254261_i32 = arith.constant -2073254261 : i32
    %21 = vector.broadcast %c-2073254261_i32 : i32 to vector<4x256xi32>
    %22 = arith.muli %20, %21 : vector<4x256xi32>
    %c16_i32_0 = arith.constant 16 : i32
    %23 = vector.broadcast %c16_i32_0 : i32 to vector<4x256xi32>
    %24 = arith.shrui %22, %23 : vector<4x256xi32>
    %25 = arith.xori %22, %24 : vector<4x256xi32>
    %c9_i32 = arith.constant 9 : i32
    %26 = vector.broadcast %c9_i32 : i32 to vector<4x256xi32>
    %27 = arith.shrui %25, %26 : vector<4x256xi32>
    %c1065353216_i32 = arith.constant 1065353216 : i32
    %28 = vector.broadcast %c1065353216_i32 : i32 to vector<4x256xi32>
    %29 = arith.ori %27, %28 : vector<4x256xi32>
    %30 = tpu.bitcast %29 : vector<4x256xi32> -> vector<4x256xf32>
    %cst = arith.constant 2.000000e+00 : f32
    %31 = vector.broadcast %cst : f32 to vector<4x256xf32>
    %32 = arith.subf %31, %30 : vector<4x256xf32>
    %c1_i32_1 = arith.constant 1 : i32
    %33 = vector.broadcast %c1_i32_1 : i32 to vector<4x256xi32>
    %34 = arith.ori %12, %33 : vector<4x256xi32>
    %c16_i32_2 = arith.constant 16 : i32
    %35 = vector.broadcast %c16_i32_2 : i32 to vector<4x256xi32>
    %36 = arith.shrui %34, %35 : vector<4x256xi32>
    %37 = arith.xori %34, %36 : vector<4x256xi32>
    %c2146121005_i32_3 = arith.constant 2146121005 : i32
    %38 = vector.broadcast %c2146121005_i32_3 : i32 to vector<4x256xi32>
    %39 = arith.muli %37, %38 : vector<4x256xi32>
    %c15_i32_4 = arith.constant 15 : i32
    %40 = vector.broadcast %c15_i32_4 : i32 to vector<4x256xi32>
    %41 = arith.shrui %39, %40 : vector<4x256xi32>
    %42 = arith.xori %39, %41 : vector<4x256xi32>
    %c-2073254261_i32_5 = arith.constant -2073254261 : i32
    %43 = vector.broadcast %c-2073254261_i32_5 : i32 to vector<4x256xi32>
    %44 = arith.muli %42, %43 : vector<4x256xi32>
    %c16_i32_6 = arith.constant 16 : i32
    %45 = vector.broadcast %c16_i32_6 : i32 to vector<4x256xi32>
    %46 = arith.shrui %44, %45 : vector<4x256xi32>
    %47 = arith.xori %44, %46 : vector<4x256xi32>
    %c9_i32_7 = arith.constant 9 : i32
    %48 = vector.broadcast %c9_i32_7 : i32 to vector<4x256xi32>
    %49 = arith.shrui %47, %48 : vector<4x256xi32>
    %c1065353216_i32_8 = arith.constant 1065353216 : i32
    %50 = vector.broadcast %c1065353216_i32_8 : i32 to vector<4x256xi32>
    %51 = arith.ori %49, %50 : vector<4x256xi32>
    %52 = tpu.bitcast %51 : vector<4x256xi32> -> vector<4x256xf32>
    %cst_9 = arith.constant 2.000000e+00 : f32
    %53 = vector.broadcast %cst_9 : f32 to vector<4x256xf32>
    %54 = arith.subf %53, %52 : vector<4x256xf32>
    %55 = math.log %32 : vector<4x256xf32>
    %cst_10 = arith.constant -2.000000e+00 : f32
    %56 = vector.broadcast %cst_10 : f32 to vector<4x256xf32>
    %57 = arith.mulf %56, %55 : vector<4x256xf32>
    %58 = math.sqrt %57 : vector<4x256xf32>
    %cst_11 = arith.constant 6.28318548 : f32
    %59 = vector.broadcast %cst_11 : f32 to vector<4x256xf32>
    %60 = arith.mulf %59, %54 : vector<4x256xf32>
    %cst_12 = arith.constant 1.57079637 : f32
    %61 = vector.broadcast %cst_12 : f32 to vector<4x256xf32>
    %62 = arith.addf %60, %61 : vector<4x256xf32>
    %63 = math.sin %62 : vector<4x256xf32>
    %64 = arith.mulf %58, %63 : vector<4x256xf32>
    %65 = math.sin %60 : vector<4x256xf32>
    %66 = arith.mulf %58, %65 : vector<4x256xf32>
    %c0 = arith.constant 0 : index
    %c0_13 = arith.constant 0 : index
    %67 = vector.load %arg1[%c0, %c0_13] : memref<8x256xf32, #tpu.memory_space<vmem>>, vector<4x256xf32>
    %68 = arith.addf %67, %64 : vector<4x256xf32>
    %c0_14 = arith.constant 0 : index
    %c0_15 = arith.constant 0 : index
    %69 = vector.load %arg2[%c0_14, %c0_15] : memref<8x256xf32, #tpu.memory_space<vmem>>, vector<4x256xf32>
    tpu.vector_store %arg2[%c0_14, %c0_15], %68 {strides = array<i32>} : memref<8x256xf32, #tpu.memory_space<vmem>>, vector<4x256xf32>,
    %c4 = arith.constant 4 : index
    %c0_16 = arith.constant 0 : index
    %70 = vector.load %arg1[%c4, %c0_16] : memref<8x256xf32, #tpu.memory_space<vmem>>, vector<4x256xf32>
    %71 = arith.addf %70, %66 : vector<4x256xf32>
    %c4_17 = arith.constant 4 : index
    %c0_18 = arith.constant 0 : index
    %72 = vector.load %arg2[%c4_17, %c0_18] : memref<8x256xf32, #tpu.memory_space<vmem>>, vector<4x256xf32>
    tpu.vector_store %arg2[%c4_17, %c0_18], %71 {strides = array<i32>} : memref<8x256xf32, #tpu.memory_space<vmem>>, vector<4x256xf32>,
    return
  }
  func.func @transform_0(%arg0: i32) -> (i32, i32) {
    %c0_i32 = arith.constant 0 : i32
    %c0_i32_0 = arith.constant 0 : i32
    return %arg0, %c0_i32 : i32, i32
  }
  func.func @transform_1(%arg0: i32) -> (i32, i32) {
    %c0_i32 = arith.constant 0 : i32
    %c0_i32_0 = arith.constant 0 : i32
    return %arg0, %c0_i32 : i32, i32
  }
}

</mosaic_0001>

<llo_original>
// kernel: tpu_custom_call.1
$region0: #{tpu_custom_call.1}
  #allocation0 [shape = 'u32[]', space=smem, size = 0x4, offset = 0x4, fixed_abs, tag = 'smem constant byte address 0x4 - core index']
  #allocation1 [shape = 'u32[144,128]{1,0:T(1,128)}', space=vmem, size = 0x12000, scoped, tag = 'internal scratch']
  %s0 = inlined_call_operand.hbm [shape: f32[8,256], index: 0, kind: input, shape index: {}]
  %s1 = inlined_call_operand.hbm [shape: f32[8,256], index: 1, kind: output, shape index: {}]
  %s2 = sld [smem:[#allocation0]]
  $region18: #{tpu_custom_call.1} parent=0
    _
  %s4 = ssub.s32 1, %s2
  %s5 = scalar_select 0, %s4, %s2
  $region1: #{tpu_custom_call.1} parent=0
    #allocation2 [shape = 'u8[8192]{0}', space=vmem, size = 0x2000, scoped, tag = 'input window, operand 0, single buffered']
    #allocation3 [shape = 's32[1]{0}', space=sflag, size = 0x4, scoped, tag = 'scoped memory for tpu_custom_call.1']
    #allocation4 [shape = 's32[1]{0}', space=sflag, size = 0x4, scoped, tag = 'scoped memory for tpu_custom_call.1']
    #allocation5 [shape = 'u8[8192]{0}', space=vmem, size = 0x2000, scoped, tag = 'output window, operand 0, single buffered']
    %6 = vsyncpa [#allocation3], 0
    %7 = vsyncpa [#allocation4], 0
    // Predicated region
    $region2: #{tpu_custom_call.1} parent=1 // pred_check
      _
    $region3: #{tpu_custom_call.1} parent=1 // pred_check_branch
      %9 = sbr.rel (0) target = $region5
    $region4: #{tpu_custom_call.1} parent=1 // pred_region
      %s11 = ssub.s32 256, 256
      %12 = vsyncadd [#allocation3], %s11
      %s14 = sshll.u32 [#allocation2], 4
      %s15 = int_to_ptr.vmem [resolvable:$true] %s14
      %17 = dma.hbm_to_vmem [thread:$0]  %s0, 256, %s15, [#allocation3]
    $region5: #{tpu_custom_call.1} parent=1 // pred_fallthru
      _
    // Predicated region
    $region6: #{tpu_custom_call.1} parent=1 // pred_check
      _
    $region7: #{tpu_custom_call.1} parent=1 // pred_check_branch
      %19 = sbr.rel (0) target = $region9
    $region8: #{tpu_custom_call.1} parent=1 // pred_region
      %20 = dma.done [#allocation3], 256
    $region9: #{tpu_custom_call.1} parent=1 // pred_fallthru
      _
    %v21 = vlaneseq
    %v22 = vshrl.u32 %v21, 7
    %v23 = vlaneseq
    %v24 = vand.u32 %v23, 127
    %v25 = vadd.s32 %v24, 128
    %s26 = smul.u32 0, 1024
    %v27 = vmul.u32 %v22, 256
    %v28 = vstv %s26
    %v29 = vadd.s32 %v28, %v27
    %v30 = vadd.s32 %v29, %v24
    %v31 = vadd.s32 %v29, %v25
    %v32 = vshll.u32 %v30, 1
    %v33 = vshll.u32 %v31, 1
    %v34 = vshrl.u32 %v32, 16
    %v35 = vshrl.u32 %v33, 16
    %v36 = vxor.u32 %v32, %v34
    %v37 = vxor.u32 %v33, %v35
    %v38 = vmul.u32 %v36, 2146121005
    %v39 = vmul.u32 %v37, 2146121005
    %v40 = vshrl.u32 %v38, 15
    %v41 = vshrl.u32 %v39, 15
    %v42 = vxor.u32 %v38, %v40
    %v43 = vxor.u32 %v39, %v41
    %v44 = vmul.u32 %v42, 2221713035
    %v45 = vmul.u32 %v43, 2221713035
    %v46 = vshrl.u32 %v44, 16
    %v47 = vshrl.u32 %v45, 16
    %v48 = vxor.u32 %v44, %v46
    %v49 = vxor.u32 %v45, %v47
    %v50 = vshrl.u32 %v48, 9
    %v51 = vshrl.u32 %v49, 9
    %v52 = vor.u32 %v50, 1065353216
    %v53 = vor.u32 %v51, 1065353216
    %v56 = vsub.f32 2.0, %v52
    %v57 = vsub.f32 2.0, %v53
    %v58 = vor.u32 %v32, 1
    %v59 = vor.u32 %v33, 1
    %v60 = vshrl.u32 %v58, 16
    %v61 = vshrl.u32 %v59, 16
    %v62 = vxor.u32 %v58, %v60
    %v63 = vxor.u32 %v59, %v61
    %v64 = vmul.u32 %v62, 2146121005
    %v65 = vmul.u32 %v63, 2146121005
    %v66 = vshrl.u32 %v64, 15
    %v67 = vshrl.u32 %v65, 15
    %v68 = vxor.u32 %v64, %v66
    %v69 = vxor.u32 %v65, %v67
    %v70 = vmul.u32 %v68, 2221713035
    %v71 = vmul.u32 %v69, 2221713035
    %v72 = vshrl.u32 %v70, 16
    %v73 = vshrl.u32 %v71, 16
    %v74 = vxor.u32 %v70, %v72
    %v75 = vxor.u32 %v71, %v73
    %v76 = vshrl.u32 %v74, 9
    %v77 = vshrl.u32 %v75, 9
    %v78 = vor.u32 %v76, 1065353216
    %v79 = vor.u32 %v77, 1065353216
    %v82 = vsub.f32 2.0, %v78
    %v83 = vsub.f32 2.0, %v79
    %v84 = vlog2.pop %v56
    %v85 = vmul.f32 %v84, 0.6931472
    %v86 = vlog2.pop %v57
    %v87 = vmul.f32 %v86, 0.6931472
    %v88 = vmul.f32 %v85, -2.0
    %v89 = vmul.f32 %v87, -2.0
    %v90 = vrsqrt.pop %v88
    %v91 = vmul.f32 %v88, %v90
    %vm92 = vcmp.eq.f32.partialorder %v88, inf
    %v93 = vsel %vm92, %v88, %v91
    %vm94 = vcmp.eq.f32.partialorder %v88, 0.0
    %v95 = vand.u32 %v88, 2147483648
    %v96 = vsel %vm94, %v95, %v93
    %v97 = vrsqrt.pop %v89
    %v98 = vmul.f32 %v89, %v97
    %vm99 = vcmp.eq.f32.partialorder %v89, inf
    %v100 = vsel %vm99, %v89, %v98
    %vm101 = vcmp.eq.f32.partialorder %v89, 0.0
    %v102 = vand.u32 %v89, 2147483648
    %v103 = vsel %vm101, %v102, %v100
    %v104 = vmul.f32 %v82, 6.2831855
    %v105 = vmul.f32 %v83, 6.2831855
    %v106 = vadd.f32 %v104, 1.5707964
    %v107 = vadd.f32 %v105, 1.5707964
    %v108 = vand.u32 2147483647, %v106
    %vm109 = vcmp.le.f32.partialorder %v108, 0.7853982
    %vm110 = vcmp.lt.s32.totalorder %v106, 0
    %v111 = vand.u32 %v106, 2139095040
    %v112 = vshrl.u32 %v111, 23
    %v113 = vsub.s32 %v112, 127
    %v114 = vand.u32 2147483647, %v106
    %v115 = vand.u32 %v114, 8388607
    %v116 = vor.u32 %v115, 8388608
    %v117 = vsub.s32 0, %v116
    %v118 = vadd.s32 %v113, 1
    %vm119 = vcmp.gt.s32.totalorder %v118, 0
    %v120 = vsel %vm119, %v118, 0
    %v121 = vshrl.u32 %v120, 5
    %v122 = vand.u32 %v120, 31
    %v123 = vsub.s32 32, %v122
    %v124 = vshrl.u32 683565275, %v123
    %v125 = vshll.u32 683565275, %v122
    %v126 = vshrl.u32 2475754826, %v123
    %v127 = vor.u32 %v125, %v126
    %v128 = vshll.u32 2475754826, %v122
    %v129 = vshrl.u32 2131351028, %v123
    %v130 = vor.u32 %v128, %v129
    %v131 = vshll.u32 2131351028, %v122
    %v132 = vshrl.u32 2102212464, %v123
    %v133 = vor.u32 %v131, %v132
    %v134 = vshll.u32 2102212464, %v122
    %v135 = vshrl.u32 920167782, %v123
    %v136 = vor.u32 %v134, %v135
    %v137 = vshll.u32 920167782, %v122
    %v138 = vshrl.u32 1326507024, %v123
    %v139 = vor.u32 %v137, %v138
    %vm140 = vcmp.lt.s32.totalorder %v121, 1
    %vm141 = vcmp.lt.s32.totalorder %v121, 2
    %vm142 = vcmp.lt.s32.totalorder %v121, 3
    %vm143 = vcmp.lt.s32.totalorder %v121, 4
    %v144 = vsel %vm140, %v124, %v127
    %v145 = vsel %vm143, %v133, 2102212464
    %v146 = vsel %vm142, %v130, %v145
    %v147 = vsel %vm141, %v144, %v146
    %v148 = vsel %vm140, %v127, %v130
    %v149 = vsel %vm143, %v136, 920167782
    %v150 = vsel %vm142, %v133, %v149
    %v151 = vsel %vm141, %v148, %v150
    %v152 = vsel %vm140, %v130, %v133
    %v153 = vsel %vm143, %v139, 1326507024
    %v154 = vsel %vm142, %v136, %v153
    %v155 = vsel %vm141, %v152, %v154
    %v156 = vshll.u32 %v116, 8
    %v157 = vmul.u32.u64.compose %v156, %v155
    %v158 = vextract.low.u32 %v157
    %v159 = vextract.high.u32 %v157
    %v160 = vmul.u32.u64.compose %v156, %v151
    %v161 = vextract.low.u32 %v160
    %v162 = vextract.high.u32 %v160
    %v163 = vmul.u32 %v156, %v147
    %v164 = vadd.s32 %v159, %v161
    %vm165 = vc.u32 %v159, %v161
    %v166 = vadd.s32 %v162, 1
    %v167 = vsel %vm165, %v166, %v162
    %v168 = vadd.s32 %v163, %v167
    %v169 = vadd.s32 %v168, 536870912
    %v170 = vshrl.u32 %v169, 30
    %v171 = vshll.u32 %v170, 30
    %v172 = vsub.s32 %v168, %v171
    %vm173 = vcmp.lt.s32.totalorder %v172, 0
    %v174 = vsub.s32 0, %v172
    %v175 = vsel %vm173, %v174, %v172
    %v176 = vclz %v175
    %v177 = vsub.s32 %v176, 2
    %vm178 = vcmp.gt.s32.totalorder 0, %v177
    %v179 = vsel %vm178, 0, %v177
    %v180 = vsub.s32 32, %v179
    %v181 = vshll.u32 %v172, %v179
    %v182 = vshrl.u32 %v164, %v180
    %v183 = vor.u32 %v181, %v182
    %v184 = vsub.s32 4294967266, %v179
    %v185 = vadd.s32 %v184, 127
    %v186 = vshll.u32 %v185, 23
    %v187 = vor.u32 4788187, %v186
    %v188 = vand.u32 2147483647, %v187
    %v190 = vcvt.s32.f32 %v183
    %v191 = vmul.f32 %v190, %v188
    %v192 = vxor.u32 %v191, 2147483648
    %v193 = vsel %vm110, %v192, %v191
    %v194 = vsub.s32 4, %v170
    %v195 = vsel %vm110, %v194, %v170
    %v196 = vsel %vm109, %v106, %v193
    %v197 = vsel %vm109, 0, %v195
    %v198 = vcosq.f32.pop %v196
    %v199 = vsinq.f32.pop %v196
    %vm200 = vweird.f32 %v106
    %v201 = vadd.s32 %v197, 3
    %v202 = vand.u32 %v201, 3
    %vm203 = vcmp.lt.s32.totalorder %v202, 2
    %vm204 = vcmp.eq.s32.totalorder %v202, 0
    %v205 = vxor.u32 %v199, 2147483648
    %v206 = vsel %vm204, %v198, %v205
    %vm207 = vcmp.eq.s32.totalorder %v202, 2
    %v208 = vxor.u32 %v198, 2147483648
    %v209 = vsel %vm207, %v208, %v199
    %v210 = vsel %vm203, %v206, %v209
    %v211 = vsel %vm200, nan, %v210
    %v212 = vand.u32 2147483647, %v107
    %vm213 = vcmp.le.f32.partialorder %v212, 0.7853982
    %vm214 = vcmp.lt.s32.totalorder %v107, 0
    %v215 = vand.u32 %v107, 2139095040
    %v216 = vshrl.u32 %v215, 23
    %v217 = vsub.s32 %v216, 127
    %v218 = vand.u32 2147483647, %v107
    %v219 = vand.u32 %v218, 8388607
    %v220 = vor.u32 %v219, 8388608
    %v221 = vsub.s32 0, %v220
    %v222 = vadd.s32 %v217, 1
    %vm223 = vcmp.gt.s32.totalorder %v222, 0
    %v224 = vsel %vm223, %v222, 0
    %v225 = vshrl.u32 %v224, 5
    %v226 = vand.u32 %v224, 31
    %v227 = vsub.s32 32, %v226
    %v228 = vshrl.u32 683565275, %v227
    %v229 = vshll.u32 683565275, %v226
    %v230 = vshrl.u32 2475754826, %v227
    %v231 = vor.u32 %v229, %v230
    %v232 = vshll.u32 2475754826, %v226
    %v233 = vshrl.u32 2131351028, %v227
    %v234 = vor.u32 %v232, %v233
    %v235 = vshll.u32 2131351028, %v226
    %v236 = vshrl.u32 2102212464, %v227
    %v237 = vor.u32 %v235, %v236
    %v238 = vshll.u32 2102212464, %v226
    %v239 = vshrl.u32 920167782, %v227
    %v240 = vor.u32 %v238, %v239
    %v241 = vshll.u32 920167782, %v226
    %v242 = vshrl.u32 1326507024, %v227
    %v243 = vor.u32 %v241, %v242
    %vm244 = vcmp.lt.s32.totalorder %v225, 1
    %vm245 = vcmp.lt.s32.totalorder %v225, 2
    %vm246 = vcmp.lt.s32.totalorder %v225, 3
    %vm247 = vcmp.lt.s32.totalorder %v225, 4
    %v248 = vsel %vm244, %v228, %v231
    %v249 = vsel %vm247, %v237, 2102212464
    %v250 = vsel %vm246, %v234, %v249
    %v251 = vsel %vm245, %v248, %v250
    %v252 = vsel %vm244, %v231, %v234
    %v253 = vsel %vm247, %v240, 920167782
    %v254 = vsel %vm246, %v237, %v253
    %v255 = vsel %vm245, %v252, %v254
    %v256 = vsel %vm244, %v234, %v237
    %v257 = vsel %vm247, %v243, 1326507024
    %v258 = vsel %vm246, %v240, %v257
    %v259 = vsel %vm245, %v256, %v258
    %v260 = vshll.u32 %v220, 8
    %v261 = vmul.u32.u64.compose %v260, %v259
    %v262 = vextract.low.u32 %v261
    %v263 = vextract.high.u32 %v261
    %v264 = vmul.u32.u64.compose %v260, %v255
    %v265 = vextract.low.u32 %v264
    %v266 = vextract.high.u32 %v264
    %v267 = vmul.u32 %v260, %v251
    %v268 = vadd.s32 %v263, %v265
    %vm269 = vc.u32 %v263, %v265
    %v270 = vadd.s32 %v266, 1
    %v271 = vsel %vm269, %v270, %v266
    %v272 = vadd.s32 %v267, %v271
    %v273 = vadd.s32 %v272, 536870912
    %v274 = vshrl.u32 %v273, 30
    %v275 = vshll.u32 %v274, 30
    %v276 = vsub.s32 %v272, %v275
    %vm277 = vcmp.lt.s32.totalorder %v276, 0
    %v278 = vsub.s32 0, %v276
    %v279 = vsel %vm277, %v278, %v276
    %v280 = vclz %v279
    %v281 = vsub.s32 %v280, 2
    %vm282 = vcmp.gt.s32.totalorder 0, %v281
    %v283 = vsel %vm282, 0, %v281
    %v284 = vsub.s32 32, %v283
    %v285 = vshll.u32 %v276, %v283
    %v286 = vshrl.u32 %v268, %v284
    %v287 = vor.u32 %v285, %v286
    %v288 = vsub.s32 4294967266, %v283
    %v289 = vadd.s32 %v288, 127
    %v290 = vshll.u32 %v289, 23
    %v291 = vor.u32 4788187, %v290
    %v292 = vand.u32 2147483647, %v291
    %v294 = vcvt.s32.f32 %v287
    %v295 = vmul.f32 %v294, %v292
    %v296 = vxor.u32 %v295, 2147483648
    %v297 = vsel %vm214, %v296, %v295
    %v298 = vsub.s32 4, %v274
    %v299 = vsel %vm214, %v298, %v274
    %v300 = vsel %vm213, %v107, %v297
    %v301 = vsel %vm213, 0, %v299
    %v302 = vcosq.f32.pop %v300
    %v303 = vsinq.f32.pop %v300
    %vm304 = vweird.f32 %v107
    %v305 = vadd.s32 %v301, 3
    %v306 = vand.u32 %v305, 3
    %vm307 = vcmp.lt.s32.totalorder %v306, 2
    %vm308 = vcmp.eq.s32.totalorder %v306, 0
    %v309 = vxor.u32 %v303, 2147483648
    %v310 = vsel %vm308, %v302, %v309
    %vm311 = vcmp.eq.s32.totalorder %v306, 2
    %v312 = vxor.u32 %v302, 2147483648
    %v313 = vsel %vm311, %v312, %v303
    %v314 = vsel %vm307, %v310, %v313
    %v315 = vsel %vm304, nan, %v314
    %v316 = vmul.f32 %v96, %v211
    %v317 = vmul.f32 %v103, %v315
    %v318 = vand.u32 2147483647, %v104
    %vm319 = vcmp.le.f32.partialorder %v318, 0.7853982
    %vm320 = vcmp.lt.s32.totalorder %v104, 0
    %v321 = vand.u32 %v104, 2139095040
    %v322 = vshrl.u32 %v321, 23
    %v323 = vsub.s32 %v322, 127
    %v324 = vand.u32 2147483647, %v104
    %v325 = vand.u32 %v324, 8388607
    %v326 = vor.u32 %v325, 8388608
    %v327 = vsub.s32 0, %v326
    %v328 = vadd.s32 %v323, 1
    %vm329 = vcmp.gt.s32.totalorder %v328, 0
    %v330 = vsel %vm329, %v328, 0
    %v331 = vshrl.u32 %v330, 5
    %v332 = vand.u32 %v330, 31
    %v333 = vsub.s32 32, %v332
    %v334 = vshrl.u32 683565275, %v333
    %v335 = vshll.u32 683565275, %v332
    %v336 = vshrl.u32 2475754826, %v333
    %v337 = vor.u32 %v335, %v336
    %v338 = vshll.u32 2475754826, %v332
    %v339 = vshrl.u32 2131351028, %v333
    %v340 = vor.u32 %v338, %v339
    %v341 = vshll.u32 2131351028, %v332
    %v342 = vshrl.u32 2102212464, %v333
    %v343 = vor.u32 %v341, %v342
    %v344 = vshll.u32 2102212464, %v332
    %v345 = vshrl.u32 920167782, %v333
    %v346 = vor.u32 %v344, %v345
    %v347 = vshll.u32 920167782, %v332
    %v348 = vshrl.u32 1326507024, %v333
    %v349 = vor.u32 %v347, %v348
    %vm350 = vcmp.lt.s32.totalorder %v331, 1
    %vm351 = vcmp.lt.s32.totalorder %v331, 2
    %vm352 = vcmp.lt.s32.totalorder %v331, 3
    %vm353 = vcmp.lt.s32.totalorder %v331, 4
    %v354 = vsel %vm350, %v334, %v337
    %v355 = vsel %vm353, %v343, 2102212464
    %v356 = vsel %vm352, %v340, %v355
    %v357 = vsel %vm351, %v354, %v356
    %v358 = vsel %vm350, %v337, %v340
    %v359 = vsel %vm353, %v346, 920167782
    %v360 = vsel %vm352, %v343, %v359
    %v361 = vsel %vm351, %v358, %v360
    %v362 = vsel %vm350, %v340, %v343
    %v363 = vsel %vm353, %v349, 1326507024
    %v364 = vsel %vm352, %v346, %v363
    %v365 = vsel %vm351, %v362, %v364
    %v366 = vshll.u32 %v326, 8
    %v367 = vmul.u32.u64.compose %v366, %v365
    %v368 = vextract.low.u32 %v367
    %v369 = vextract.high.u32 %v367
    %v370 = vmul.u32.u64.compose %v366, %v361
    %v371 = vextract.low.u32 %v370
    %v372 = vextract.high.u32 %v370
    %v373 = vmul.u32 %v366, %v357
    %v374 = vadd.s32 %v369, %v371
    %vm375 = vc.u32 %v369, %v371
    %v376 = vadd.s32 %v372, 1
    %v377 = vsel %vm375, %v376, %v372
    %v378 = vadd.s32 %v373, %v377
    %v379 = vadd.s32 %v378, 536870912
    %v380 = vshrl.u32 %v379, 30
    %v381 = vshll.u32 %v380, 30
    %v382 = vsub.s32 %v378, %v381
    %vm383 = vcmp.lt.s32.totalorder %v382, 0
    %v384 = vsub.s32 0, %v382
    %v385 = vsel %vm383, %v384, %v382
    %v386 = vclz %v385
    %v387 = vsub.s32 %v386, 2
    %vm388 = vcmp.gt.s32.totalorder 0, %v387
    %v389 = vsel %vm388, 0, %v387
    %v390 = vsub.s32 32, %v389
    %v391 = vshll.u32 %v382, %v389
    %v392 = vshrl.u32 %v374, %v390
    %v393 = vor.u32 %v391, %v392
    %v394 = vsub.s32 4294967266, %v389
    %v395 = vadd.s32 %v394, 127
    %v396 = vshll.u32 %v395, 23
    %v397 = vor.u32 4788187, %v396
    %v398 = vand.u32 2147483647, %v397
    %v400 = vcvt.s32.f32 %v393
    %v401 = vmul.f32 %v400, %v398
    %v402 = vxor.u32 %v401, 2147483648
    %v403 = vsel %vm320, %v402, %v401
    %v404 = vsub.s32 4, %v380
    %v405 = vsel %vm320, %v404, %v380
    %v406 = vsel %vm319, %v104, %v403
    %v407 = vsel %vm319, 0, %v405
    %v408 = vcosq.f32.pop %v406
    %v409 = vsinq.f32.pop %v406
    %vm410 = vweird.f32 %v104
    %v411 = vadd.s32 %v407, 3
    %v412 = vand.u32 %v411, 3
    %vm413 = vcmp.lt.s32.totalorder %v412, 2
    %vm414 = vcmp.eq.s32.totalorder %v412, 0
    %v415 = vxor.u32 %v409, 2147483648
    %v416 = vsel %vm414, %v408, %v415
    %vm417 = vcmp.eq.s32.totalorder %v412, 2
    %v418 = vxor.u32 %v408, 2147483648
    %v419 = vsel %vm417, %v418, %v409
    %v420 = vsel %vm413, %v416, %v419
    %v421 = vsel %vm410, nan, %v420
    %v422 = vand.u32 2147483647, %v105
    %vm423 = vcmp.le.f32.partialorder %v422, 0.7853982
    %vm424 = vcmp.lt.s32.totalorder %v105, 0
    %v425 = vand.u32 %v105, 2139095040
    %v426 = vshrl.u32 %v425, 23
    %v427 = vsub.s32 %v426, 127
    %v428 = vand.u32 2147483647, %v105
    %v429 = vand.u32 %v428, 8388607
    %v430 = vor.u32 %v429, 8388608
    %v431 = vsub.s32 0, %v430
    %v432 = vadd.s32 %v427, 1
    %vm433 = vcmp.gt.s32.totalorder %v432, 0
    %v434 = vsel %vm433, %v432, 0
    %v435 = vshrl.u32 %v434, 5
    %v436 = vand.u32 %v434, 31
    %v437 = vsub.s32 32, %v436
    %v438 = vshrl.u32 683565275, %v437
    %v439 = vshll.u32 683565275, %v436
    %v440 = vshrl.u32 2475754826, %v437
    %v441 = vor.u32 %v439, %v440
    %v442 = vshll.u32 2475754826, %v436
    %v443 = vshrl.u32 2131351028, %v437
    %v444 = vor.u32 %v442, %v443
    %v445 = vshll.u32 2131351028, %v436
    %v446 = vshrl.u32 2102212464, %v437
    %v447 = vor.u32 %v445, %v446
    %v448 = vshll.u32 2102212464, %v436
    %v449 = vshrl.u32 920167782, %v437
    %v450 = vor.u32 %v448, %v449
    %v451 = vshll.u32 920167782, %v436
    %v452 = vshrl.u32 1326507024, %v437
    %v453 = vor.u32 %v451, %v452
    %vm454 = vcmp.lt.s32.totalorder %v435, 1
    %vm455 = vcmp.lt.s32.totalorder %v435, 2
    %vm456 = vcmp.lt.s32.totalorder %v435, 3
    %vm457 = vcmp.lt.s32.totalorder %v435, 4
    %v458 = vsel %vm454, %v438, %v441
    %v459 = vsel %vm457, %v447, 2102212464
    %v460 = vsel %vm456, %v444, %v459
    %v461 = vsel %vm455, %v458, %v460
    %v462 = vsel %vm454, %v441, %v444
    %v463 = vsel %vm457, %v450, 920167782
    %v464 = vsel %vm456, %v447, %v463
    %v465 = vsel %vm455, %v462, %v464
    %v466 = vsel %vm454, %v444, %v447
    %v467 = vsel %vm457, %v453, 1326507024
    %v468 = vsel %vm456, %v450, %v467
    %v469 = vsel %vm455, %v466, %v468
    %v470 = vshll.u32 %v430, 8
    %v471 = vmul.u32.u64.compose %v470, %v469
    %v472 = vextract.low.u32 %v471
    %v473 = vextract.high.u32 %v471
    %v474 = vmul.u32.u64.compose %v470, %v465
    %v475 = vextract.low.u32 %v474
    %v476 = vextract.high.u32 %v474
    %v477 = vmul.u32 %v470, %v461
    %v478 = vadd.s32 %v473, %v475
    %vm479 = vc.u32 %v473, %v475
    %v480 = vadd.s32 %v476, 1
    %v481 = vsel %vm479, %v480, %v476
    %v482 = vadd.s32 %v477, %v481
    %v483 = vadd.s32 %v482, 536870912
    %v484 = vshrl.u32 %v483, 30
    %v485 = vshll.u32 %v484, 30
    %v486 = vsub.s32 %v482, %v485
    %vm487 = vcmp.lt.s32.totalorder %v486, 0
    %v488 = vsub.s32 0, %v486
    %v489 = vsel %vm487, %v488, %v486
    %v490 = vclz %v489
    %v491 = vsub.s32 %v490, 2
    %vm492 = vcmp.gt.s32.totalorder 0, %v491
    %v493 = vsel %vm492, 0, %v491
    %v494 = vsub.s32 32, %v493
    %v495 = vshll.u32 %v486, %v493
    %v496 = vshrl.u32 %v478, %v494
    %v497 = vor.u32 %v495, %v496
    %v498 = vsub.s32 4294967266, %v493
    %v499 = vadd.s32 %v498, 127
    %v500 = vshll.u32 %v499, 23
    %v501 = vor.u32 4788187, %v500
    %v502 = vand.u32 2147483647, %v501
    %v504 = vcvt.s32.f32 %v497
    %v505 = vmul.f32 %v504, %v502
    %v506 = vxor.u32 %v505, 2147483648
    %v507 = vsel %vm424, %v506, %v505
    %v508 = vsub.s32 4, %v484
    %v509 = vsel %vm424, %v508, %v484
    %v510 = vsel %vm423, %v105, %v507
    %v511 = vsel %vm423, 0, %v509
    %v512 = vcosq.f32.pop %v510
    %v513 = vsinq.f32.pop %v510
    %vm514 = vweird.f32 %v105
    %v515 = vadd.s32 %v511, 3
    %v516 = vand.u32 %v515, 3
    %vm517 = vcmp.lt.s32.totalorder %v516, 2
    %vm518 = vcmp.eq.s32.totalorder %v516, 0
    %v519 = vxor.u32 %v513, 2147483648
    %v520 = vsel %vm518, %v512, %v519
    %vm521 = vcmp.eq.s32.totalorder %v516, 2
    %v522 = vxor.u32 %v512, 2147483648
    %v523 = vsel %vm521, %v522, %v513
    %v524 = vsel %vm517, %v520, %v523
    %v525 = vsel %vm514, nan, %v524
    %v526 = vmul.f32 %v96, %v421
    %v527 = vmul.f32 %v103, %v525
    %v528 = vld [vmem:[#allocation2] sm:$0xf]
    %v529 = vld [vmem:[#allocation2 + $0x8] sm:$0xf]
    %v530 = vadd.f32 %v528, %v316
    %v531 = vadd.f32 %v529, %v317
    %532 = vst [vmem:[#allocation5] sm:$0xf] %v530
    %533 = vst [vmem:[#allocation5 + $0x8] sm:$0xf] %v531
    %v534 = vld [vmem:[#allocation2] sm:$0xf0]
    %v535 = vld [vmem:[#allocation2 + $0x8] sm:$0xf0]
    %v538 = vrot.slane %v526, 4
    %v539 = vrot.slane %v527, 4
    %v542 = vadd.f32 %v534, %v538
    %v543 = vadd.f32 %v535, %v539
    %544 = vst [vmem:[#allocation5] sm:$0xf0] %v542
    %545 = vst [vmem:[#allocation5 + $0x8] sm:$0xf0] %v543
    // Predicated region
    $region10: #{tpu_custom_call.1} parent=1 // pred_check
      _
    $region11: #{tpu_custom_call.1} parent=1 // pred_check_branch
      %547 = sbr.rel (0) target = $region13
    $region12: #{tpu_custom_call.1} parent=1 // pred_region
      %s549 = ssub.s32 256, 256
      %550 = vsyncadd [#allocation4], %s549
      %s552 = sshll.u32 [#allocation5], 4
      %s553 = int_to_ptr.vmem [resolvable:$true] %s552
      %555 = dma.vmem_to_hbm [thread:$0]  %s553, 256, %s1, [#allocation4]
    $region13: #{tpu_custom_call.1} parent=1 // pred_fallthru
      _
    // Predicated region
    $region14: #{tpu_custom_call.1} parent=1 // pred_check
      _
    $region15: #{tpu_custom_call.1} parent=1 // pred_check_branch
      %557 = sbr.rel (0) target = $region17
    $region16: #{tpu_custom_call.1} parent=1 // pred_region
      %558 = dma.done [#allocation4], 256
    $region17: #{tpu_custom_call.1} parent=1 // pred_fallthru
      _
    %559 = vsyncpa [#allocation3], 1
    %560 = vsyncpa [#allocation4], 1

</llo_original>
